<compile_context>
chip_gen: v7x
topology: tpu7x:2x2x1
jax: 0.10.0
libtpu: 0.0.40
codegen_flags: <defaults>
</compile_context>

<pallas_src>
import functools

import jax
import jax.numpy as jnp
from jax.experimental import pallas as pl
from jax.experimental.pallas import tpu as pltpu


_LANE = 128
_SUB = 8
_TILE = _SUB * _LANE          # 1024-element alignment unit
_BLOCK_ROWS = 2048            # 2048 x 128 f32 = 1 MiB per input block


def _prep(t: jax.Array) -> jax.Array:
    """Flatten to a lane-dense (rows, 128) slab with rows % 8 == 0.

    Reshape is free; a zero-pad copy is only made when t.size is not already a
    multiple of 1024.  Padded zeros are identical for both members of a pair,
    so they contribute exactly 0 to the sum of squared differences.
    """
    flat = t.reshape(-1)
    pad = (-flat.size) % _TILE
    if pad:
        flat = jnp.concatenate([flat, jnp.zeros((pad,), flat.dtype)])
    return flat.reshape(-1, _LANE)


def _make_fused_kernel(ct, nb1, nb2, br1, br2, rows1, rows2):
    nb = nb1 + nb2
    mask1 = (rows1 % br1) != 0        # static: is the last pair-1 block partial?
    mask2 = (rows2 % br2) != 0

    def fold(sq, br):
        # (br, 128) -> (8, 128) partial sums via pure vreg adds (no XLU).
        if br == _SUB:
            return sq
        return jnp.sum(sq.reshape(br // _SUB, _SUB, _LANE), axis=0)

    def kernel(a1_ref, b1_ref, a2_ref, b2_ref, out1_ref, out2_ref,
               acc1_ref, acc2_ref):
        c = pl.program_id(0)          # parallel chunk
        j = pl.program_id(1)          # sequential step within chunk
        t = c * ct + j                # global task id

        @pl.when(j == 0)
        def _():
            acc1_ref[...] = jnp.zeros_like(acc1_ref)
            acc2_ref[...] = jnp.zeros_like(acc2_ref)

        @pl.when(t < nb1)             # pair 1: (x_recon, x)
        def _():
            d = a1_ref[...].astype(jnp.float32) - b1_ref[...].astype(jnp.float32)
            sq = d * d
            if mask1:
                rid = (jax.lax.broadcasted_iota(jnp.int32, (br1, _LANE), 0)
                       + t * br1)
                sq = jnp.where(rid < rows1, sq, 0.0)
            acc1_ref[...] += fold(sq, br1)

        @pl.when(jnp.logical_and(t >= nb1, t < nb))   # pair 2: (z_q, z)
        def _():
            d = a2_ref[...].astype(jnp.float32) - b2_ref[...].astype(jnp.float32)
            sq = d * d
            if mask2:
                rid = (jax.lax.broadcasted_iota(jnp.int32, (br2, _LANE), 0)
                       + (t - nb1) * br2)
                sq = jnp.where(rid < rows2, sq, 0.0)
            acc2_ref[...] += fold(sq, br2)

        @pl.when(j == ct - 1)
        def _():
            out1_ref[...] = acc1_ref[...]
            out2_ref[...] = acc2_ref[...]

    return kernel


def _fused_sum_sq_diff(a1, b1, a2, b2):
    """Returns (sum((a1-b1)^2), sum((a2-b2)^2)) with f32 accumulation."""
    assert a1.shape == b1.shape and a2.shape == b2.shape
    s1a, s1b = _prep(a1), _prep(b1)
    s2a, s2b = _prep(a2), _prep(b2)
    rows1, rows2 = s1a.shape[0], s2a.shape[0]

    br1 = min(_BLOCK_ROWS, rows1)     # rows are multiples of 8, so br is too
    br2 = min(_BLOCK_ROWS, rows2)
    nb1 = pl.cdiv(rows1, br1)
    nb2 = pl.cdiv(rows2, br2)
    nb = nb1 + nb2

    nc = 2                            # parallel chunks (one per v7x TensorCore)
    ct = pl.cdiv(nb, nc)              # tasks per chunk

    kernel = _make_fused_kernel(ct, nb1, nb2, br1, br2, rows1, rows2)

    def idx1(c, j):                   # pair-1 block index (clamped when inactive)
        return (jnp.minimum(c * ct + j, nb1 - 1), 0)

    def idx2(c, j):                   # pair-2 block index (clamped when inactive)
        return (jnp.maximum(jnp.minimum(c * ct + j - nb1, nb2 - 1), 0), 0)

    out1, out2 = pl.pallas_call(
        kernel,
        out_shape=(jax.ShapeDtypeStruct((nc * _SUB, _LANE), jnp.float32),
                   jax.ShapeDtypeStruct((nc * _SUB, _LANE), jnp.float32)),
        grid=(nc, ct),
        in_specs=[
            pl.BlockSpec((br1, _LANE), idx1),
            pl.BlockSpec((br1, _LANE), idx1),
            pl.BlockSpec((br2, _LANE), idx2),
            pl.BlockSpec((br2, _LANE), idx2),
        ],
        out_specs=(
            pl.BlockSpec((_SUB, _LANE), lambda c, j: (c, 0)),
            pl.BlockSpec((_SUB, _LANE), lambda c, j: (c, 0)),
        ),
        scratch_shapes=[
            pltpu.VMEM((_SUB, _LANE), jnp.float32),
            pltpu.VMEM((_SUB, _LANE), jnp.float32),
        ],
        compiler_params=pltpu.CompilerParams(
            dimension_semantics=("parallel", "arbitrary")),
    )(s1a, s1b, s2a, s2b)

    return jnp.sum(out1), jnp.sum(out2)


def vqvae_loss(x_recon, x, z, z_q, commitment_cost: float = 0.25):
    """Forward pass of VQVAELoss (values identical to the PyTorch module).

    recon_loss = mean((x_recon - x)^2)
    vq_loss    = mse(sg[z_q], z) + commitment_cost * mse(z_q, sg[z])
               = (1 + commitment_cost) * mean((z_q - z)^2)   (forward values)
    loss       = recon_loss + vq_loss
    """
    # TODO(synk): a custom VJP would be needed to reproduce the .detach()
    # (stop-gradient) structure of the PyTorch backward pass; forward matches.
    ssd_x, ssd_z = _fused_sum_sq_diff(x_recon, x, z_q, z)
    recon_loss = ssd_x / float(x_recon.size)
    mse_zq_z = ssd_z / float(z_q.size)
    vq_loss = (1.0 + commitment_cost) * mse_zq_z
    loss = recon_loss + vq_loss
    return loss, recon_loss, vq_loss


if __name__ == "__main__":
    key = jax.random.PRNGKey(0)
    k1, k2, k3, k4 = jax.random.split(key, 4)

    # Small shapes consistent with a VQ-VAE: images NCHW, latents NCHW.
    x_shape = (2, 4, 16, 16)   # reconstructed / target image
    z_shape = (2, 8, 4, 4)     # encoder output / quantized latent

    x_recon = jax.random.normal(k1, x_shape, dtype=jnp.float32)
    x = jax.random.normal(k2, x_shape, dtype=jnp.float32)
    z = jax.random.normal(k3, z_shape, dtype=jnp.float32)
    z_q = jax.random.normal(k4, z_shape, dtype=jnp.float32)

    loss_fn = jax.jit(functools.partial(vqvae_loss, commitment_cost=0.25))
    loss, recon_loss, vq_loss = loss_fn(x_recon, x, z, z_q)
    jax.block_until_ready((loss, recon_loss, vq_loss))

    # Reference check (same semantics as torch.nn.MSELoss(reduction='mean')).
    ref_recon = jnp.mean((x_recon - x) ** 2)
    ref_mse_zq_z = jnp.mean((z_q - z) ** 2)
    ref_vq = ref_mse_zq_z + 0.25 * ref_mse_zq_z
    ref_loss = ref_recon + ref_vq

    assert jnp.allclose(recon_loss, ref_recon, rtol=1e-5, atol=1e-6)
    assert jnp.allclose(vq_loss, ref_vq, rtol=1e-5, atol=1e-6)
    assert jnp.allclose(loss, ref_loss, rtol=1e-5, atol=1e-6)

    print("KERNEL_OK")
</pallas_src>

<mosaic_0001>
module attributes {stable_mosaic.version = 11 : i64} {
  func.func @kernel(%arg0: i32, %arg1: i32, %arg2: memref<16x128xf32, #tpu.memory_space<vmem>>, %arg3: memref<16x128xf32, #tpu.memory_space<vmem>>, %arg4: memref<8x128xf32, #tpu.memory_space<vmem>>, %arg5: memref<8x128xf32, #tpu.memory_space<vmem>>, %arg6: memref<8x128xf32, #tpu.memory_space<vmem>>, %arg7: memref<8x128xf32, #tpu.memory_space<vmem>>, %arg8: memref<8x128xf32, #tpu.memory_space<vmem>>, %arg9: memref<8x128xf32, #tpu.memory_space<vmem>>) attributes {dimension_semantics = [#tpu.dimension_semantics<parallel>, #tpu.dimension_semantics<arbitrary>], iteration_bounds = array<i64: 2, 1>, scalar_prefetch = 0 : i64, scratch_operands = 2 : i64, tpu.core_type = #tpu.core_type<tc>, window_params = [{transform_indices = @transform_0, window_bounds = array<i64: 16, 128>}, {transform_indices = @transform_1, window_bounds = array<i64: 16, 128>}, {transform_indices = @transform_2, window_bounds = array<i64: 8, 128>}, {transform_indices = @transform_3, window_bounds = array<i64: 8, 128>}, {transform_indices = @transform_4, window_bounds = array<i64: 8, 128>}, {transform_indices = @transform_5, window_bounds = array<i64: 8, 128>}]} {
    %c1_i32 = arith.constant 1 : i32
    %0 = arith.muli %arg0, %c1_i32 : i32
    %1 = arith.addi %0, %arg1 : i32
    %c0_i32 = arith.constant 0 : i32
    %2 = arith.cmpi eq, %arg1, %c0_i32 : i32
    %3 = arith.extui %2 : i1 to i32
    %c0_i32_0 = arith.constant 0 : i32
    %4 = arith.cmpi ne, %3, %c0_i32_0 : i32
    scf.if %4 {
      %cst = arith.constant 0.000000e+00 : f32
      %16 = vector.broadcast %cst : f32 to vector<8x128xf32>
      %c0 = arith.constant 0 : index
      %c0_7 = arith.constant 0 : index
      %17 = vector.load %arg8[%c0, %c0_7] : memref<8x128xf32, #tpu.memory_space<vmem>>, vector<8x128xf32>
      tpu.vector_store %arg8[%c0, %c0_7], %16 {strides = array<i32>} : memref<8x128xf32, #tpu.memory_space<vmem>>, vector<8x128xf32>,
      %cst_8 = arith.constant 0.000000e+00 : f32
      %18 = vector.broadcast %cst_8 : f32 to vector<8x128xf32>
      %c0_9 = arith.constant 0 : index
      %c0_10 = arith.constant 0 : index
      %19 = vector.load %arg9[%c0_9, %c0_10] : memref<8x128xf32, #tpu.memory_space<vmem>>, vector<8x128xf32>
      tpu.vector_store %arg9[%c0_9, %c0_10], %18 {strides = array<i32>} : memref<8x128xf32, #tpu.memory_space<vmem>>, vector<8x128xf32>,
    } else {
    }
    %c1_i32_1 = arith.constant 1 : i32
    %5 = arith.cmpi slt, %1, %c1_i32_1 : i32
    %6 = arith.extui %5 : i1 to i32
    %c0_i32_2 = arith.constant 0 : i32
    %7 = arith.cmpi ne, %6, %c0_i32_2 : i32
    scf.if %7 {
      %c0 = arith.constant 0 : index
      %c0_7 = arith.constant 0 : index
      %16 = vector.load %arg2[%c0, %c0_7] : memref<16x128xf32, #tpu.memory_space<vmem>>, vector<16x128xf32>
      %c0_8 = arith.constant 0 : index
      %c0_9 = arith.constant 0 : index
      %17 = vector.load %arg3[%c0_8, %c0_9] : memref<16x128xf32, #tpu.memory_space<vmem>>, vector<16x128xf32>
      %18 = arith.subf %16, %17 : vector<16x128xf32>
      %19 = arith.mulf %18, %18 : vector<16x128xf32>
      %c0_10 = arith.constant 0 : index
      %c0_11 = arith.constant 0 : index
      %20 = vector.load %arg8[%c0_10, %c0_11] : memref<8x128xf32, #tpu.memory_space<vmem>>, vector<8x128xf32>
      %21 = vector.shape_cast %19 : vector<16x128xf32> to vector<2x8x128xf32>
      %cst = arith.constant dense<0.000000e+00> : vector<8x128xf32>
      %22 = vector.multi_reduction <add>, %21, %cst [0] : vector<2x8x128xf32> to vector<8x128xf32>
      %23 = arith.addf %20, %22 : vector<8x128xf32>
      %c0_12 = arith.constant 0 : index
      %c0_13 = arith.constant 0 : index
      %24 = vector.load %arg8[%c0_12, %c0_13] : memref<8x128xf32, #tpu.memory_space<vmem>>, vector<8x128xf32>
      tpu.vector_store %arg8[%c0_12, %c0_13], %23 {strides = array<i32>} : memref<8x128xf32, #tpu.memory_space<vmem>>, vector<8x128xf32>,
    } else {
    }
    %c1_i32_3 = arith.constant 1 : i32
    %8 = arith.cmpi sge, %1, %c1_i32_3 : i32
    %c2_i32 = arith.constant 2 : i32
    %9 = arith.cmpi slt, %1, %c2_i32 : i32
    %10 = arith.andi %8, %9 : i1
    %11 = arith.extui %10 : i1 to i32
    %c0_i32_4 = arith.constant 0 : i32
    %12 = arith.cmpi ne, %11, %c0_i32_4 : i32
    scf.if %12 {
      %c0 = arith.constant 0 : index
      %c0_7 = arith.constant 0 : index
      %16 = vector.load %arg4[%c0, %c0_7] : memref<8x128xf32, #tpu.memory_space<vmem>>, vector<8x128xf32>
      %c0_8 = arith.constant 0 : index
      %c0_9 = arith.constant 0 : index
      %17 = vector.load %arg5[%c0_8, %c0_9] : memref<8x128xf32, #tpu.memory_space<vmem>>, vector<8x128xf32>
      %18 = arith.subf %16, %17 : vector<8x128xf32>
      %19 = arith.mulf %18, %18 : vector<8x128xf32>
      %c0_10 = arith.constant 0 : index
      %c0_11 = arith.constant 0 : index
      %20 = vector.load %arg9[%c0_10, %c0_11] : memref<8x128xf32, #tpu.memory_space<vmem>>, vector<8x128xf32>
      %21 = arith.addf %20, %19 : vector<8x128xf32>
      %c0_12 = arith.constant 0 : index
      %c0_13 = arith.constant 0 : index
      %22 = vector.load %arg9[%c0_12, %c0_13] : memref<8x128xf32, #tpu.memory_space<vmem>>, vector<8x128xf32>
      tpu.vector_store %arg9[%c0_12, %c0_13], %21 {strides = array<i32>} : memref<8x128xf32, #tpu.memory_space<vmem>>, vector<8x128xf32>,
    } else {
    }
    %c0_i32_5 = arith.constant 0 : i32
    %13 = arith.cmpi eq, %arg1, %c0_i32_5 : i32
    %14 = arith.extui %13 : i1 to i32
    %c0_i32_6 = arith.constant 0 : i32
    %15 = arith.cmpi ne, %14, %c0_i32_6 : i32
    scf.if %15 {
      %c0 = arith.constant 0 : index
      %c0_7 = arith.constant 0 : index
      %16 = vector.load %arg8[%c0, %c0_7] : memref<8x128xf32, #tpu.memory_space<vmem>>, vector<8x128xf32>
      %c0_8 = arith.constant 0 : index
      %c0_9 = arith.constant 0 : index
      %17 = vector.load %arg6[%c0_8, %c0_9] : memref<8x128xf32, #tpu.memory_space<vmem>>, vector<8x128xf32>
      tpu.vector_store %arg6[%c0_8, %c0_9], %16 {strides = array<i32>} : memref<8x128xf32, #tpu.memory_space<vmem>>, vector<8x128xf32>,
      %c0_10 = arith.constant 0 : index
      %c0_11 = arith.constant 0 : index
      %18 = vector.load %arg9[%c0_10, %c0_11] : memref<8x128xf32, #tpu.memory_space<vmem>>, vector<8x128xf32>
      %c0_12 = arith.constant 0 : index
      %c0_13 = arith.constant 0 : index
      %19 = vector.load %arg7[%c0_12, %c0_13] : memref<8x128xf32, #tpu.memory_space<vmem>>, vector<8x128xf32>
      tpu.vector_store %arg7[%c0_12, %c0_13], %18 {strides = array<i32>} : memref<8x128xf32, #tpu.memory_space<vmem>>, vector<8x128xf32>,
    } else {
    }
    return
  }
  func.func @transform_0(%arg0: i32, %arg1: i32) -> (i32, i32) {
    %c1_i32 = arith.constant 1 : i32
    %0 = arith.muli %arg0, %c1_i32 : i32
    %1 = arith.addi %0, %arg1 : i32
    %c0_i32 = arith.constant 0 : i32
    %2 = arith.minsi %1, %c0_i32 : i32
    %c0_i32_0 = arith.constant 0 : i32
    %c0_i32_1 = arith.constant 0 : i32
    return %2, %c0_i32_0 : i32, i32
  }
  func.func @transform_1(%arg0: i32, %arg1: i32) -> (i32, i32) {
    %c1_i32 = arith.constant 1 : i32
    %0 = arith.muli %arg0, %c1_i32 : i32
    %1 = arith.addi %0, %arg1 : i32
    %c0_i32 = arith.constant 0 : i32
    %2 = arith.minsi %1, %c0_i32 : i32
    %c0_i32_0 = arith.constant 0 : i32
    %c0_i32_1 = arith.constant 0 : i32
    return %2, %c0_i32_0 : i32, i32
  }
  func.func @transform_2(%arg0: i32, %arg1: i32) -> (i32, i32) {
    %c1_i32 = arith.constant 1 : i32
    %0 = arith.muli %arg0, %c1_i32 : i32
    %1 = arith.addi %0, %arg1 : i32
    %c1_i32_0 = arith.constant 1 : i32
    %2 = arith.subi %1, %c1_i32_0 : i32
    %c0_i32 = arith.constant 0 : i32
    %3 = arith.minsi %2, %c0_i32 : i32
    %c0_i32_1 = arith.constant 0 : i32
    %4 = arith.maxsi %3, %c0_i32_1 : i32
    %c0_i32_2 = arith.constant 0 : i32
    %c0_i32_3 = arith.constant 0 : i32
    return %4, %c0_i32_2 : i32, i32
  }
  func.func @transform_3(%arg0: i32, %arg1: i32) -> (i32, i32) {
    %c1_i32 = arith.constant 1 : i32
    %0 = arith.muli %arg0, %c1_i32 : i32
    %1 = arith.addi %0, %arg1 : i32
    %c1_i32_0 = arith.constant 1 : i32
    %2 = arith.subi %1, %c1_i32_0 : i32
    %c0_i32 = arith.constant 0 : i32
    %3 = arith.minsi %2, %c0_i32 : i32
    %c0_i32_1 = arith.constant 0 : i32
    %4 = arith.maxsi %3, %c0_i32_1 : i32
    %c0_i32_2 = arith.constant 0 : i32
    %c0_i32_3 = arith.constant 0 : i32
    return %4, %c0_i32_2 : i32, i32
  }
  func.func @transform_4(%arg0: i32, %arg1: i32) -> (i32, i32) {
    %c0_i32 = arith.constant 0 : i32
    %c0_i32_0 = arith.constant 0 : i32
    return %arg0, %c0_i32 : i32, i32
  }
  func.func @transform_5(%arg0: i32, %arg1: i32) -> (i32, i32) {
    %c0_i32 = arith.constant 0 : i32
    %c0_i32_0 = arith.constant 0 : i32
    return %arg0, %c0_i32 : i32, i32
  }
}

</mosaic_0001>

<llo_original>
// kernel: vqvae_loss.1
$region0: #{vqvae_loss.1}
  #allocation0 [shape = 'u32[]', space=smem, size = 0x4, offset = 0x4, fixed_abs, tag = 'smem constant byte address 0x4 - core index']
  #allocation1 [shape = 'u32[144,128]{1,0:T(1,128)}', space=vmem, size = 0x12000, scoped, tag = 'internal scratch']
  #allocation2 [shape = 'f32[8,128]{1,0:T(8,128)}', space=vmem, size = 0x1000, scoped, tag = 'scratch operand']
  #allocation3 [shape = 'f32[8,128]{1,0:T(8,128)}', space=vmem, size = 0x1000, scoped, tag = 'scratch operand']
  %s0 = inlined_call_operand.vmem [shape: f32[16,128], index: 0, kind: input, shape index: {}]
  %s1 = inlined_call_operand.vmem [shape: f32[16,128], index: 1, kind: input, shape index: {}]
  %s2 = inlined_call_operand.vmem [shape: f32[8,128], index: 2, kind: input, shape index: {}]
  %s3 = inlined_call_operand.vmem [shape: f32[8,128], index: 3, kind: input, shape index: {}]
  %s4 = inlined_call_operand.vmem [shape: f32[16,128], index: 4, kind: output, shape index: {0}]
  %s5 = inlined_call_operand.vmem [shape: f32[16,128], index: 5, kind: output, shape index: {1}]
  %6 = xla_tuple %s4, %s5
  %s7 = sld [smem:[#allocation0]]
  $region73: #{vqvae_loss.1} parent=0
    _
  %s9 = ssub.s32 1, %s7
  %s10 = scalar_select 0, %s9, %s7
  loop: start=0, step=1, limit=4
  $region2: #{vqvae_loss.1} parent=0 // loop_pre_header
    _
  $region3: #{vqvae_loss.1} parent=0 // loop_header
    %s12 = sphi 0, %s16
    %p13 = scmp.ge.s32.totalorder %s12, 4
    %s19 = sphi 0, %s31
    %s20 = sphi 0, %s27
    %s21 = sphi 0, %s19
    %s22 = sphi 0, %s20
    %s23 = sphi 0, %s21
    %s24 = sphi 0, %s22
    %s40 = sphi 0, %s42
    %s43 = sphi 0, %s40
    %s44 = sphi 0, %s43
    %s60 = sphi 0, %s44
    %s72 = sphi 0, %s74
    %s75 = sphi 0, %s72
    %s76 = sphi 0, %s75
    %s92 = sphi 0, %s76
    %s110 = sphi 0, %s112
    %s113 = sphi 0, %s110
    %s114 = sphi 0, %s113
    %s130 = sphi 0, %s114
    %s148 = sphi 0, %s150
    %s151 = sphi 0, %s148
    %s152 = sphi 0, %s151
    %s168 = sphi 0, %s152
    %s174 = sphi 0, %s176
    %s177 = sphi 0, %s174
    %s178 = sphi 0, %s177
    %s194 = sphi 0, %s178
    %s200 = sphi 0, %s202
    %s203 = sphi 0, %s200
    %s204 = sphi 0, %s203
    %s220 = sphi 0, %s204
  $region4: #{vqvae_loss.1} parent=0 // loop_header_branch
    %15 = sbr.rel (%p13) target = $region8
  $region5: #{vqvae_loss.1} parent=0 // loop_body
    %s17 = ssub.s32 %s12, 1
    %s18 = ssub.s32 %s12, 2
    %s25 = sadd.s32 1, %s20
    %p26 = scmp.ge.s32.totalorder %s25, 1
    %s27 = scalar_select %p26, 0, %s25
    %s28 = sadd.s32 1, %s19
    %s29 = scalar_select %p26, %s28, %s19
    %p30 = scmp.ge.s32.totalorder %s29, 2
    %s31 = scalar_select %p30, 0, %s29
    %s32 = sadd.s32 %s19, %s20
    %p33 = scmp.lt.s32.totalorder %s32, 0
    %s34 = scalar_select %p33, %s32, 0
    %s35 = sadd.s32 %s31, %s27
    %p36 = scmp.lt.s32.totalorder %s35, 0
    %s37 = scalar_select %p36, %s35, 0
    %s38 = ssub.s32 %s34, %s37
    %p39 = scmp.eq.s32.totalorder %s38, 0
    %s41 = sadd.s32 %s40, 1
    %s42 = scalar_select %p39, %s40, %s41
    %p45 = pneg %p39
    %p46 = scmp.eq.s32.totalorder %s12, 1
    %p47 = por %p45, %p46
    %p48 = scmp.ne.s32.totalorder %s40, %s43
    %p49 = scmp.eq.s32.totalorder %s12, 0
    %p50 = por %p48, %p49
    %p51 = scmp.ne.s32.totalorder %s40, %s43
    %p52 = scmp.eq.s32.totalorder %s17, 1
    %p53 = por %p51, %p52
    %p54 = scmp.ne.s32.totalorder %s43, %s44
    %p55 = scmp.eq.s32.totalorder %s17, 0
    %p56 = por %p54, %p55
    %p57 = scmp.ne.s32.totalorder %s43, %s44
    %p58 = scmp.eq.s32.totalorder %s18, 1
    %p59 = por %p57, %p58
    %p61 = scmp.ne.s32.totalorder %s44, %s60
    %p62 = scmp.eq.s32.totalorder %s18, 0
    %p63 = por %p61, %p62
    %s64 = sadd.s32 %s19, %s20
    %p65 = scmp.lt.s32.totalorder %s64, 0
    %s66 = scalar_select %p65, %s64, 0
    %s67 = sadd.s32 %s31, %s27
    %p68 = scmp.lt.s32.totalorder %s67, 0
    %s69 = scalar_select %p68, %s67, 0
    %s70 = ssub.s32 %s66, %s69
    %p71 = scmp.eq.s32.totalorder %s70, 0
    %s73 = sadd.s32 %s72, 1
    %s74 = scalar_select %p71, %s72, %s73
    %p77 = pneg %p71
    %p78 = scmp.eq.s32.totalorder %s12, 1
    %p79 = por %p77, %p78
    %p80 = scmp.ne.s32.totalorder %s72, %s75
    %p81 = scmp.eq.s32.totalorder %s12, 0
    %p82 = por %p80, %p81
    %p83 = scmp.ne.s32.totalorder %s72, %s75
    %p84 = scmp.eq.s32.totalorder %s17, 1
    %p85 = por %p83, %p84
    %p86 = scmp.ne.s32.totalorder %s75, %s76
    %p87 = scmp.eq.s32.totalorder %s17, 0
    %p88 = por %p86, %p87
    %p89 = scmp.ne.s32.totalorder %s75, %s76
    %p90 = scmp.eq.s32.totalorder %s18, 1
    %p91 = por %p89, %p90
    %p93 = scmp.ne.s32.totalorder %s76, %s92
    %p94 = scmp.eq.s32.totalorder %s18, 0
    %p95 = por %p93, %p94
    %s96 = sadd.s32 %s19, %s20
    %s97 = ssub.s32 %s96, 1
    %p98 = scmp.lt.s32.totalorder %s97, 0
    %s99 = scalar_select %p98, %s97, 0
    %p100 = scmp.gt.s32.totalorder %s99, 0
    %s101 = scalar_select %p100, %s99, 0
    %s102 = sadd.s32 %s31, %s27
    %s103 = ssub.s32 %s102, 1
    %p104 = scmp.lt.s32.totalorder %s103, 0
    %s105 = scalar_select %p104, %s103, 0
    %p106 = scmp.gt.s32.totalorder %s105, 0
    %s107 = scalar_select %p106, %s105, 0
    %s108 = ssub.s32 %s101, %s107
    %p109 = scmp.eq.s32.totalorder %s108, 0
    %s111 = sadd.s32 %s110, 1
    %s112 = scalar_select %p109, %s110, %s111
    %p115 = pneg %p109
    %p116 = scmp.eq.s32.totalorder %s12, 1
    %p117 = por %p115, %p116
    %p118 = scmp.ne.s32.totalorder %s110, %s113
    %p119 = scmp.eq.s32.totalorder %s12, 0
    %p120 = por %p118, %p119
    %p121 = scmp.ne.s32.totalorder %s110, %s113
    %p122 = scmp.eq.s32.totalorder %s17, 1
    %p123 = por %p121, %p122
    %p124 = scmp.ne.s32.totalorder %s113, %s114
    %p125 = scmp.eq.s32.totalorder %s17, 0
    %p126 = por %p124, %p125
    %p127 = scmp.ne.s32.totalorder %s113, %s114
    %p128 = scmp.eq.s32.totalorder %s18, 1
    %p129 = por %p127, %p128
    %p131 = scmp.ne.s32.totalorder %s114, %s130
    %p132 = scmp.eq.s32.totalorder %s18, 0
    %p133 = por %p131, %p132
    %s134 = sadd.s32 %s19, %s20
    %s135 = ssub.s32 %s134, 1
    %p136 = scmp.lt.s32.totalorder %s135, 0
    %s137 = scalar_select %p136, %s135, 0
    %p138 = scmp.gt.s32.totalorder %s137, 0
    %s139 = scalar_select %p138, %s137, 0
    %s140 = sadd.s32 %s31, %s27
    %s141 = ssub.s32 %s140, 1
    %p142 = scmp.lt.s32.totalorder %s141, 0
    %s143 = scalar_select %p142, %s141, 0
    %p144 = scmp.gt.s32.totalorder %s143, 0
    %s145 = scalar_select %p144, %s143, 0
    %s146 = ssub.s32 %s139, %s145
    %p147 = scmp.eq.s32.totalorder %s146, 0
    %s149 = sadd.s32 %s148, 1
    %s150 = scalar_select %p147, %s148, %s149
    %p153 = pneg %p147
    %p154 = scmp.eq.s32.totalorder %s12, 1
    %p155 = por %p153, %p154
    %p156 = scmp.ne.s32.totalorder %s148, %s151
    %p157 = scmp.eq.s32.totalorder %s12, 0
    %p158 = por %p156, %p157
    %p159 = scmp.ne.s32.totalorder %s148, %s151
    %p160 = scmp.eq.s32.totalorder %s17, 1
    %p161 = por %p159, %p160
    %p162 = scmp.ne.s32.totalorder %s151, %s152
    %p163 = scmp.eq.s32.totalorder %s17, 0
    %p164 = por %p162, %p163
    %p165 = scmp.ne.s32.totalorder %s151, %s152
    %p166 = scmp.eq.s32.totalorder %s18, 1
    %p167 = por %p165, %p166
    %p169 = scmp.ne.s32.totalorder %s152, %s168
    %p170 = scmp.eq.s32.totalorder %s18, 0
    %p171 = por %p169, %p170
    %s172 = ssub.s32 %s19, %s31
    %p173 = scmp.eq.s32.totalorder %s172, 0
    %s175 = sadd.s32 %s174, 1
    %s176 = scalar_select %p173, %s174, %s175
    %p179 = pneg %p173
    %p180 = scmp.eq.s32.totalorder %s12, 1
    %p181 = por %p179, %p180
    %p182 = scmp.ne.s32.totalorder %s174, %s177
    %p183 = scmp.eq.s32.totalorder %s12, 0
    %p184 = por %p182, %p183
    %p185 = scmp.ne.s32.totalorder %s174, %s177
    %p186 = scmp.eq.s32.totalorder %s17, 1
    %p187 = por %p185, %p186
    %p188 = scmp.ne.s32.totalorder %s177, %s178
    %p189 = scmp.eq.s32.totalorder %s17, 0
    %p190 = por %p188, %p189
    %p191 = scmp.ne.s32.totalorder %s177, %s178
    %p192 = scmp.eq.s32.totalorder %s18, 1
    %p193 = por %p191, %p192
    %p195 = scmp.ne.s32.totalorder %s178, %s194
    %p196 = scmp.eq.s32.totalorder %s18, 0
    %p197 = por %p195, %p196
    %s198 = ssub.s32 %s19, %s31
    %p199 = scmp.eq.s32.totalorder %s198, 0
    %s201 = sadd.s32 %s200, 1
    %s202 = scalar_select %p199, %s200, %s201
    %p205 = pneg %p199
    %p206 = scmp.eq.s32.totalorder %s12, 1
    %p207 = por %p205, %p206
    %p208 = scmp.ne.s32.totalorder %s200, %s203
    %p209 = scmp.eq.s32.totalorder %s12, 0
    %p210 = por %p208, %p209
    %p211 = scmp.ne.s32.totalorder %s200, %s203
    %p212 = scmp.eq.s32.totalorder %s17, 1
    %p213 = por %p211, %p212
    %p214 = scmp.ne.s32.totalorder %s203, %s204
    %p215 = scmp.eq.s32.totalorder %s17, 0
    %p216 = por %p214, %p215
    %p217 = scmp.ne.s32.totalorder %s203, %s204
    %p218 = scmp.eq.s32.totalorder %s18, 1
    %p219 = por %p217, %p218
    %p221 = scmp.ne.s32.totalorder %s204, %s220
    %p222 = scmp.eq.s32.totalorder %s18, 0
    %p223 = por %p221, %p222
    %p224 = scmp.le.s32.totalorder 1, %s12
    %p225 = scmp.lt.s32.totalorder %s12, 3
    %p226 = pnand %p224, %p225
    %p227 = pneg %p226
    // Predicated region
    $region9: #{vqvae_loss.1} parent=5 // pred_check
      _
    $region10: #{vqvae_loss.1} parent=5 // pred_check_branch
      %229 = sbr.rel (%p226) target = $region12
    $region11: #{vqvae_loss.1} parent=5 // pred_region
      %s230 = ssub.s32 %s12, 1
    $region12: #{vqvae_loss.1} parent=5 // pred_fallthru
      _
    %p231 = scmp.lt.s32.totalorder %s12, 2
    // Predicated region
    $region13: #{vqvae_loss.1} parent=5 // pred_check
      %p232 = pneg %p231
    $region14: #{vqvae_loss.1} parent=5 // pred_check_branch
      %234 = sbr.rel (%p232) target = $region16
    $region15: #{vqvae_loss.1} parent=5 // pred_region
      // Predicated region
      $region17: #{vqvae_loss.1} parent=15 // pred_check
        %p235 = pneg %p50
      $region18: #{vqvae_loss.1} parent=15 // pred_check_branch
        %237 = sbr.rel (%p235) target = $region20
      $region19: #{vqvae_loss.1} parent=15 // pred_region
        %s238 = sadd.s32 %s19, %s20
        %p239 = scmp.lt.s32.totalorder %s238, 0
        %s240 = scalar_select %p239, %s238, 0
        %s241 = smul.u32 2, %s240
        %p242 = scmp.lt.s32.totalorder %s241, 1
        %s243 = scalar_select %p242, %s241, 1
        %s244 = smul.addr %s243, 8
        %s245 = scalar_lea.vmem %s0, %s244
        %s246 = sadd.s32 %s19, %s20
        %p247 = scmp.lt.s32.totalorder %s246, 0
        %s248 = scalar_select %p247, %s246, 0
        %s249 = smul.u32 2, %s248
      $region20: #{vqvae_loss.1} parent=15 // pred_fallthru
        _
      // Predicated region
      $region21: #{vqvae_loss.1} parent=15 // pred_check
        %p250 = pneg %p82
      $region22: #{vqvae_loss.1} parent=15 // pred_check_branch
        %252 = sbr.rel (%p250) target = $region24
      $region23: #{vqvae_loss.1} parent=15 // pred_region
        %s253 = sadd.s32 %s19, %s20
        %p254 = scmp.lt.s32.totalorder %s253, 0
        %s255 = scalar_select %p254, %s253, 0
        %s256 = smul.u32 2, %s255
        %p257 = scmp.lt.s32.totalorder %s256, 1
        %s258 = scalar_select %p257, %s256, 1
        %s259 = smul.addr %s258, 8
        %s260 = scalar_lea.vmem %s1, %s259
        %s261 = sadd.s32 %s19, %s20
        %p262 = scmp.lt.s32.totalorder %s261, 0
        %s263 = scalar_select %p262, %s261, 0
        %s264 = smul.u32 2, %s263
      $region24: #{vqvae_loss.1} parent=15 // pred_fallthru
        _
      // Predicated region
      $region25: #{vqvae_loss.1} parent=15 // pred_check
        %p265 = pneg %p120
      $region26: #{vqvae_loss.1} parent=15 // pred_check_branch
        %267 = sbr.rel (%p265) target = $region28
      $region27: #{vqvae_loss.1} parent=15 // pred_region
        %s268 = sadd.s32 %s19, %s20
        %s269 = ssub.s32 %s268, 1
        %p270 = scmp.lt.s32.totalorder %s269, 0
        %s271 = scalar_select %p270, %s269, 0
        %p272 = scmp.gt.s32.totalorder %s271, 0
        %s273 = scalar_select %p272, %s271, 0
        %p274 = scmp.lt.s32.totalorder %s273, 0
        %s275 = scalar_select %p274, %s273, 0
        %s276 = smul.addr %s275, 8
        %s277 = scalar_lea.vmem %s2, %s276
        %s278 = sadd.s32 %s19, %s20
        %s279 = ssub.s32 %s278, 1
        %p280 = scmp.lt.s32.totalorder %s279, 0
        %s281 = scalar_select %p280, %s279, 0
        %p282 = scmp.gt.s32.totalorder %s281, 0
        %s283 = scalar_select %p282, %s281, 0
      $region28: #{vqvae_loss.1} parent=15 // pred_fallthru
        _
      // Predicated region
      $region29: #{vqvae_loss.1} parent=15 // pred_check
        %p284 = pneg %p158
      $region30: #{vqvae_loss.1} parent=15 // pred_check_branch
        %286 = sbr.rel (%p284) target = $region32
      $region31: #{vqvae_loss.1} parent=15 // pred_region
        %s287 = sadd.s32 %s19, %s20
        %s288 = ssub.s32 %s287, 1
        %p289 = scmp.lt.s32.totalorder %s288, 0
        %s290 = scalar_select %p289, %s288, 0
        %p291 = scmp.gt.s32.totalorder %s290, 0
        %s292 = scalar_select %p291, %s290, 0
        %p293 = scmp.lt.s32.totalorder %s292, 0
        %s294 = scalar_select %p293, %s292, 0
        %s295 = smul.addr %s294, 8
        %s296 = scalar_lea.vmem %s3, %s295
        %s297 = sadd.s32 %s19, %s20
        %s298 = ssub.s32 %s297, 1
        %p299 = scmp.lt.s32.totalorder %s298, 0
        %s300 = scalar_select %p299, %s298, 0
        %p301 = scmp.gt.s32.totalorder %s300, 0
        %s302 = scalar_select %p301, %s300, 0
      $region32: #{vqvae_loss.1} parent=15 // pred_fallthru
        _
    $region16: #{vqvae_loss.1} parent=5 // pred_fallthru
      _
    %p303 = scmp.le.s32.totalorder 1, %s12
    %p304 = scmp.lt.s32.totalorder %s12, 3
    %p305 = pnand %p303, %p304
    %p306 = pneg %p305
    // Predicated region
    $region33: #{vqvae_loss.1} parent=5 // pred_check
      _
    $region34: #{vqvae_loss.1} parent=5 // pred_check_branch
      %308 = sbr.rel (%p305) target = $region36
    $region35: #{vqvae_loss.1} parent=5 // pred_region
      %s309 = ssub.s32 %s12, 1
      %s310 = sadd.s32 %s21, %s22
      %p311 = scmp.lt.s32.totalorder %s310, 0
      %s312 = scalar_select %p311, %s310, 0
      %s313 = smul.u32 2, %s312
      %p314 = scmp.lt.s32.totalorder %s313, 1
      %s315 = scalar_select %p314, %s313, 1
      %s316 = smul.addr %s315, 8
      %s317 = scalar_lea.vmem %s0, %s316
      %p318 = pneg %p56
      %p319 = pneg %p53
      %s320 = sadd.s32 %s21, %s22
      %p321 = scmp.lt.s32.totalorder %s320, 0
      %s322 = scalar_select %p321, %s320, 0
      %s323 = smul.u32 2, %s322
      %p324 = scmp.lt.s32.totalorder %s323, 1
      %s325 = scalar_select %p324, %s323, 1
      %s326 = smul.addr %s325, 8
      %s327 = scalar_lea.vmem %s1, %s326
      %p328 = pneg %p88
      %p329 = pneg %p85
      %s330 = sadd.s32 %s21, %s22
      %s331 = ssub.s32 %s330, 1
      %p332 = scmp.lt.s32.totalorder %s331, 0
      %s333 = scalar_select %p332, %s331, 0
      %p334 = scmp.gt.s32.totalorder %s333, 0
      %s335 = scalar_select %p334, %s333, 0
      %p336 = scmp.lt.s32.totalorder %s335, 0
      %s337 = scalar_select %p336, %s335, 0
      %s338 = smul.addr %s337, 8
      %s339 = scalar_lea.vmem %s2, %s338
      %p340 = pneg %p126
      %p341 = pneg %p123
      %s342 = sadd.s32 %s21, %s22
      %s343 = ssub.s32 %s342, 1
      %p344 = scmp.lt.s32.totalorder %s343, 0
      %s345 = scalar_select %p344, %s343, 0
      %p346 = scmp.gt.s32.totalorder %s345, 0
      %s347 = scalar_select %p346, %s345, 0
      %p348 = scmp.lt.s32.totalorder %s347, 0
      %s349 = scalar_select %p348, %s347, 0
      %s350 = smul.addr %s349, 8
      %s351 = scalar_lea.vmem %s3, %s350
      %p352 = pneg %p164
      %p353 = pneg %p161
      %p354 = pneg %p190
      %p355 = pneg %p187
      %p356 = scmp.lt.s32.totalorder %s21, 1
      %s357 = scalar_select %p356, %s21, 1
      %s358 = smul.addr %s357, 8
      %s359 = scalar_lea.vmem %s4, %s358
      %p360 = pneg %p216
      %p361 = pneg %p213
      %p362 = scmp.lt.s32.totalorder %s21, 1
      %s363 = scalar_select %p362, %s21, 1
      %s364 = smul.addr %s363, 8
      %s365 = scalar_lea.vmem %s5, %s364
      %s366 = sadd.s32 %s21, %s22
      %p367 = scmp.lt.s32.totalorder %s366, 0
      %s368 = scalar_select %p367, %s366, 0
      %s369 = smul.u32 2, %s368
      %p370 = scmp.lt.s32.totalorder %s369, 1
      %s371 = scalar_select %p370, %s369, 1
      %s372 = smul.addr %s371, 8
      %s373 = scalar_lea.vmem %s0, %s372
      %s374 = sadd.s32 %s21, %s22
      %p375 = scmp.lt.s32.totalorder %s374, 0
      %s376 = scalar_select %p375, %s374, 0
      %s377 = smul.u32 2, %s376
      %s378 = sadd.s32 %s21, %s22
      %p379 = scmp.lt.s32.totalorder %s378, 0
      %s380 = scalar_select %p379, %s378, 0
      %s381 = smul.u32 2, %s380
      %p382 = scmp.lt.s32.totalorder %s381, 1
      %s383 = scalar_select %p382, %s381, 1
      %s384 = smul.addr %s383, 8
      %s385 = scalar_lea.vmem %s1, %s384
      %s386 = sadd.s32 %s21, %s22
      %p387 = scmp.lt.s32.totalorder %s386, 0
      %s388 = scalar_select %p387, %s386, 0
      %s389 = smul.u32 2, %s388
      %s390 = sadd.s32 %s21, %s22
      %s391 = ssub.s32 %s390, 1
      %p392 = scmp.lt.s32.totalorder %s391, 0
      %s393 = scalar_select %p392, %s391, 0
      %p394 = scmp.gt.s32.totalorder %s393, 0
      %s395 = scalar_select %p394, %s393, 0
      %p396 = scmp.lt.s32.totalorder %s395, 0
      %s397 = scalar_select %p396, %s395, 0
      %s398 = smul.addr %s397, 8
      %s399 = scalar_lea.vmem %s2, %s398
      %s400 = sadd.s32 %s21, %s22
      %s401 = ssub.s32 %s400, 1
      %p402 = scmp.lt.s32.totalorder %s401, 0
      %s403 = scalar_select %p402, %s401, 0
      %p404 = scmp.gt.s32.totalorder %s403, 0
      %s405 = scalar_select %p404, %s403, 0
      %s406 = sadd.s32 %s21, %s22
      %s407 = ssub.s32 %s406, 1
      %p408 = scmp.lt.s32.totalorder %s407, 0
      %s409 = scalar_select %p408, %s407, 0
      %p410 = scmp.gt.s32.totalorder %s409, 0
      %s411 = scalar_select %p410, %s409, 0
      %p412 = scmp.lt.s32.totalorder %s411, 0
      %s413 = scalar_select %p412, %s411, 0
      %s414 = smul.addr %s413, 8
      %s415 = scalar_lea.vmem %s3, %s414
      %s416 = sadd.s32 %s21, %s22
      %s417 = ssub.s32 %s416, 1
      %p418 = scmp.lt.s32.totalorder %s417, 0
      %s419 = scalar_select %p418, %s417, 0
      %p420 = scmp.gt.s32.totalorder %s419, 0
      %s421 = scalar_select %p420, %s419, 0
      %p422 = scmp.lt.s32.totalorder %s21, 1
      %s423 = scalar_select %p422, %s21, 1
      %s424 = smul.addr %s423, 8
      %s425 = scalar_lea.vmem %s4, %s424
      %p426 = scmp.lt.s32.totalorder %s21, 1
      %s427 = scalar_select %p426, %s21, 1
      %s428 = smul.addr %s427, 8
      %s429 = scalar_lea.vmem %s5, %s428
      %s430 = sadd.s32 %s21, %s22
      %p431 = scmp.eq.s32.totalorder %s22, 0
      // Predicated region
      $region37: #{vqvae_loss.1} parent=35 // pred_check
        %p432 = pneg %p431
      $region38: #{vqvae_loss.1} parent=35 // pred_check_branch
        %434 = sbr.rel (%p432) target = $region40
      $region39: #{vqvae_loss.1} parent=35 // pred_region
        %435 = vst [vmem:[#allocation2] sm:$0xff] 0.0
        %436 = vst [vmem:[#allocation3] sm:$0xff] 0.0
      $region40: #{vqvae_loss.1} parent=35 // pred_fallthru
        _
      %p437 = scmp.lt.s32.totalorder %s430, 1
      // Predicated region
      $region41: #{vqvae_loss.1} parent=35 // pred_check
        %p438 = pneg %p437
      $region42: #{vqvae_loss.1} parent=35 // pred_check_branch
        %440 = sbr.rel (%p438) target = $region44
      $region43: #{vqvae_loss.1} parent=35 // pred_region
        %v441 = vld [vmem:[%s373] sm:$0xff]
        %v442 = vld [vmem:[%s373 + $0x8] sm:$0xff]
        %v443 = vld [vmem:[%s385] sm:$0xff]
        %v444 = vld [vmem:[%s385 + $0x8] sm:$0xff]
        %v445 = vsub.f32 %v441, %v443
        %v446 = vsub.f32 %v442, %v444
        %v447 = vmul.f32 %v445, %v445
        %v448 = vmul.f32 %v446, %v446
        %v449 = vld [vmem:[#allocation2] sm:$0xff]
        %v450 = vadd.f32 %v447, %v448
        %v451 = vadd.f32 %v449, %v450
        %452 = vst [vmem:[#allocation2] sm:$0xff] %v451
      $region44: #{vqvae_loss.1} parent=35 // pred_fallthru
        _
      %p453 = scmp.ge.s32.totalorder %s430, 1
      %p454 = scmp.lt.s32.totalorder %s430, 2
      %p455 = pnand %p453, %p454
      %p456 = pneg %p455
      // Predicated region
      $region45: #{vqvae_loss.1} parent=35 // pred_check
        _
      $region46: #{vqvae_loss.1} parent=35 // pred_check_branch
        %458 = sbr.rel (%p455) target = $region48
      $region47: #{vqvae_loss.1} parent=35 // pred_region
        %v459 = vld [vmem:[%s399] sm:$0xff]
        %v460 = vld [vmem:[%s415] sm:$0xff]
        %v461 = vsub.f32 %v459, %v460
        %v462 = vmul.f32 %v461, %v461
        %v463 = vld [vmem:[#allocation3] sm:$0xff]
        %v464 = vadd.f32 %v463, %v462
        %465 = vst [vmem:[#allocation3] sm:$0xff] %v464
      $region48: #{vqvae_loss.1} parent=35 // pred_fallthru
        _
      // Predicated region
      $region49: #{vqvae_loss.1} parent=35 // pred_check
        %p466 = pneg %p431
      $region50: #{vqvae_loss.1} parent=35 // pred_check_branch
        %468 = sbr.rel (%p466) target = $region52
      $region51: #{vqvae_loss.1} parent=35 // pred_region
        %v469 = vld [vmem:[#allocation2] sm:$0xff]
        %470 = vst [vmem:[%s425] sm:$0xff] %v469
        %v471 = vld [vmem:[#allocation3] sm:$0xff]
        %472 = vst [vmem:[%s429] sm:$0xff] %v471
      $region52: #{vqvae_loss.1} parent=35 // pred_fallthru
        _
      %p473 = scmp.lt.s32.totalorder %s21, 1
      %s474 = scalar_select %p473, %s21, 1
      %s475 = smul.addr %s474, 8
      %s476 = scalar_lea.vmem %s4, %s475
      %p477 = scmp.lt.s32.totalorder %s21, 1
      %s478 = scalar_select %p477, %s21, 1
      %s479 = smul.addr %s478, 8
      %s480 = scalar_lea.vmem %s5, %s479
      // Predicated region
      $region53: #{vqvae_loss.1} parent=35 // pred_check
        %p481 = pneg %p187
      $region54: #{vqvae_loss.1} parent=35 // pred_check_branch
        %483 = sbr.rel (%p481) target = $region56
      $region55: #{vqvae_loss.1} parent=35 // pred_region
        _
      $region56: #{vqvae_loss.1} parent=35 // pred_fallthru
        _
      // Predicated region
      $region57: #{vqvae_loss.1} parent=35 // pred_check
        %p484 = pneg %p213
      $region58: #{vqvae_loss.1} parent=35 // pred_check_branch
        %486 = sbr.rel (%p484) target = $region60
      $region59: #{vqvae_loss.1} parent=35 // pred_region
        _
      $region60: #{vqvae_loss.1} parent=35 // pred_fallthru
        _
    $region36: #{vqvae_loss.1} parent=5 // pred_fallthru
      _
    %p487 = scmp.le.s32.totalorder 2, %s12
    // Predicated region
    $region61: #{vqvae_loss.1} parent=5 // pred_check
      %p488 = pneg %p487
    $region62: #{vqvae_loss.1} parent=5 // pred_check_branch
      %490 = sbr.rel (%p488) target = $region64
    $region63: #{vqvae_loss.1} parent=5 // pred_region
      %s491 = ssub.s32 %s12, 2
      // Predicated region
      $region65: #{vqvae_loss.1} parent=63 // pred_check
        %p492 = pneg %p193
      $region66: #{vqvae_loss.1} parent=63 // pred_check_branch
        %494 = sbr.rel (%p492) target = $region68
      $region67: #{vqvae_loss.1} parent=63 // pred_region
        %p495 = scmp.lt.s32.totalorder %s23, 1
        %s496 = scalar_select %p495, %s23, 1
        %s497 = smul.addr %s496, 8
        %s498 = scalar_lea.vmem %s4, %s497
      $region68: #{vqvae_loss.1} parent=63 // pred_fallthru
        _
      // Predicated region
      $region69: #{vqvae_loss.1} parent=63 // pred_check
        %p499 = pneg %p219
      $region70: #{vqvae_loss.1} parent=63 // pred_check_branch
        %501 = sbr.rel (%p499) target = $region72
      $region71: #{vqvae_loss.1} parent=63 // pred_region
        %p502 = scmp.lt.s32.totalorder %s23, 1
        %s503 = scalar_select %p502, %s23, 1
        %s504 = smul.addr %s503, 8
        %s505 = scalar_lea.vmem %s5, %s504
      $region72: #{vqvae_loss.1} parent=63 // pred_fallthru
        _
    $region64: #{vqvae_loss.1} parent=5 // pred_fallthru
      _
  $region6: #{vqvae_loss.1} parent=0 // loop_footer
    %s16 = sadd.s32 1, %s12
  $region7: #{vqvae_loss.1} parent=0 // loop_footer_branch
    %11 = sbr.rel target = $region3
  $region8: #{vqvae_loss.1} parent=0 // loop_exit
    _

</llo_original>
